<compile_context>
chip_gen: v7x
topology: tpu7x:2x2x1
jax: 0.10.0
libtpu: 0.0.40
codegen_flags: <defaults>
</compile_context>

<pallas_src>
import jax
import jax.numpy as jnp
from jax.experimental import pallas as pl
from jax.experimental.pallas import tpu as pltpu

LANE = 128  # TPU lane width (last-dim alignment target)


def _round_up(x, m):
    return ((x + m - 1) // m) * m


def deeponet_kernel(xb_ref, xt_ref,
                    w1b_ref, b1b_ref, w2b_ref, b2b_ref,
                    w1t_ref, b1t_ref, w2t_ref, b2t_ref,
                    o_ref):
    """One batch tile of the fused DeepONet forward pass."""
    bf16 = jnp.bfloat16
    # Branch net: Linear -> tanh -> Linear.  Matmuls take bf16 operands (native
    # MXU path) and accumulate in f32; elementwise math stays f32.
    hb = jnp.tanh(
        jnp.dot(xb_ref[...], w1b_ref[...], preferred_element_type=jnp.float32)
        + b1b_ref[...])
    branch = (jnp.dot(hb.astype(bf16), w2b_ref[...],
                      preferred_element_type=jnp.float32) + b2b_ref[...])
    # Trunk net: Linear -> tanh -> Linear.
    ht = jnp.tanh(
        jnp.dot(xt_ref[...], w1t_ref[...], preferred_element_type=jnp.float32)
        + b1t_ref[...])
    trunk = (jnp.dot(ht.astype(bf16), w2t_ref[...],
                     preferred_element_type=jnp.float32) + b2t_ref[...])
    # torch.einsum('bi,bi->b') -> row-wise dot product (XLU cross-lane reduce,
    # free filler under the MXU work above).
    o_ref[...] = jnp.sum(branch * trunk, axis=-1, keepdims=True)


def deeponet_forward(x_branch, x_trunk, params, *, tile_b=256):
    (w1b, b1b, w2b, b2b, w1t, b1t, w2t, b2t) = params
    B = x_branch.shape[0]
    db, dt = x_branch.shape[1], x_trunk.shape[1]
    hidden = w1b.shape[1]
    p = w2b.shape[1]

    # ---- shape alignment ----------------------------------------------------
    # Batch tile: multiple of 16 (bf16 sublane packing), no larger than needed.
    tile_b = _round_up(max(16, min(tile_b, _round_up(B, 16))), 16)
    b_pad = _round_up(B, tile_b)
    # Contracting dims padded to lane multiples (explicit zero-padding instead
    # of relying on implicit MXU padding).
    db_p = _round_up(db, LANE)
    dt_p = _round_up(dt, LANE)

    f32, bf16 = jnp.float32, jnp.bfloat16

    xb = jnp.pad(x_branch.astype(f32), ((0, b_pad - B), (0, db_p - db))).astype(bf16)
    xt = jnp.pad(x_trunk.astype(f32), ((0, b_pad - B), (0, dt_p - dt))).astype(bf16)
    w1b_p = jnp.pad(w1b.astype(f32), ((0, db_p - db), (0, 0))).astype(bf16)
    w1t_p = jnp.pad(w1t.astype(f32), ((0, dt_p - dt), (0, 0))).astype(bf16)
    w2b_b = w2b.astype(bf16)
    w2t_b = w2t.astype(bf16)
    b1b_f = b1b.reshape(1, hidden).astype(f32)
    b2b_f = b2b.reshape(1, p).astype(f32)
    b1t_f = b1t.reshape(1, hidden).astype(f32)
    b2t_f = b2t.reshape(1, p).astype(f32)

    num_tiles = b_pad // tile_b

    # ---- block specs --------------------------------------------------------
    def row_spec(shape):   # tiled along batch
        return pl.BlockSpec(shape, lambda i: (i, 0))

    def fix_spec(shape):   # VMEM-resident across all grid steps
        return pl.BlockSpec(shape, lambda i: (0, 0))

    in_specs = [
        row_spec((tile_b, db_p)), row_spec((tile_b, dt_p)),
        fix_spec((db_p, hidden)), fix_spec((1, hidden)),
        fix_spec((hidden, p)), fix_spec((1, p)),
        fix_spec((dt_p, hidden)), fix_spec((1, hidden)),
        fix_spec((hidden, p)), fix_spec((1, p)),
    ]
    out_specs = pl.BlockSpec((tile_b, 1), lambda i: (i, 0))

    # ---- cost estimate + VMEM budget ----------------------------------------
    flops = 2 * b_pad * (db_p * hidden + dt_p * hidden + 2 * hidden * p) + 3 * b_pad * p
    transcendentals = 2 * b_pad * hidden
    bytes_accessed = (
        (xb.size + xt.size) * 2
        + (w1b_p.size + w1t_p.size + w2b_b.size + w2t_b.size) * 2
        + (b1b_f.size + b2b_f.size + b1t_f.size + b2t_f.size) * 4
        + b_pad * 4)
    cost = pl.CostEstimate(flops=int(flops),
                           transcendentals=int(transcendentals),
                           bytes_accessed=int(bytes_accessed))

    # double-buffered I/O tiles + resident weights/biases + live f32 activations
    vmem_est = 2 * (tile_b * db_p * 2 + tile_b * dt_p * 2 + tile_b * 4)
    vmem_est += 2 * ((db_p + dt_p) * hidden * 2 + 2 * hidden * p * 2
                     + 2 * (hidden + p) * 4)
    vmem_est += 4 * tile_b * (hidden + p) * 4
    # Cap at v7x's 64 MiB physical VMEM; shrink tile_b for models that exceed it.
    vmem_limit = int(min(max(2 * vmem_est, 32 * 2**20), 64 * 2**20))

    out = pl.pallas_call(
        deeponet_kernel,
        out_shape=jax.ShapeDtypeStruct((b_pad, 1), jnp.float32),
        grid=(num_tiles,),
        in_specs=in_specs,
        out_specs=out_specs,
        compiler_params=pltpu.CompilerParams(
            dimension_semantics=("parallel",),
            vmem_limit_bytes=vmem_limit),
        cost_estimate=cost,
    )(xb, xt, w1b_p, b1b_f, w2b_b, b2b_f, w1t_p, b1t_f, w2t_b, b2t_f)

    return out[:B, 0]  # shape (B,), matches einsum('bi,bi->b')


def reference_forward(x_branch, x_trunk, params, *, matmul_dtype=jnp.bfloat16):
    """Pure-JAX reference (same precision recipe as the kernel by default)."""
    (w1b, b1b, w2b, b2b, w1t, b1t, w2t, b2t) = params
    md = matmul_dtype
    hb = jnp.tanh(jnp.dot(x_branch.astype(md), w1b.astype(md),
                          preferred_element_type=jnp.float32) + b1b)
    branch = jnp.dot(hb.astype(md), w2b.astype(md),
                     preferred_element_type=jnp.float32) + b2b
    ht = jnp.tanh(jnp.dot(x_trunk.astype(md), w1t.astype(md),
                          preferred_element_type=jnp.float32) + b1t)
    trunk = jnp.dot(ht.astype(md), w2t.astype(md),
                    preferred_element_type=jnp.float32) + b2t
    return jnp.einsum('bi,bi->b', branch, trunk)


if __name__ == "__main__":
    # Small, DeepONet-consistent shapes (lane-aligned HIDDEN / P per feedback).
    B = 8            # batch
    D_BRANCH = 16    # branch input dim (sensor values)
    D_TRUNK = 8      # trunk input dim (query coordinates)
    HIDDEN = 128     # hidden width (multiple of 128)
    P = 128          # shared latent dim 'i' in einsum('bi,bi->b')

    key = jax.random.PRNGKey(0)
    ks = jax.random.split(key, 8)

    def glorot(k, shape):
        scale = jnp.sqrt(2.0 / (shape[0] + shape[1]))
        return jax.random.normal(k, shape, dtype=jnp.float32) * scale

    w1b = glorot(ks[0], (D_BRANCH, HIDDEN))
    b1b = jnp.zeros((1, HIDDEN), jnp.float32)
    w2b = glorot(ks[1], (HIDDEN, P))
    b2b = jnp.zeros((1, P), jnp.float32)
    w1t = glorot(ks[2], (D_TRUNK, HIDDEN))
    b1t = jnp.zeros((1, HIDDEN), jnp.float32)
    w2t = glorot(ks[3], (HIDDEN, P))
    b2t = jnp.zeros((1, P), jnp.float32)
    params = (w1b, b1b, w2b, b2b, w1t, b1t, w2t, b2t)

    x_branch = jax.random.normal(ks[4], (B, D_BRANCH), dtype=jnp.float32)
    x_trunk = jax.random.normal(ks[5], (B, D_TRUNK), dtype=jnp.float32)

    out = deeponet_forward(x_branch, x_trunk, params)
    out = jax.block_until_ready(out)
    assert out.shape == (B,), out.shape

    # Precision-matched (bf16 MXU operands, f32 accumulate) reference: tight.
    ref_bf16 = reference_forward(x_branch, x_trunk, params,
                                 matmul_dtype=jnp.bfloat16)
    assert jnp.allclose(out, ref_bf16, atol=1e-2, rtol=1e-2), (out, ref_bf16)

    # Full-f32 reference: looser tolerance to account for bf16 matmul inputs.
    ref_f32 = reference_forward(x_branch, x_trunk, params,
                                matmul_dtype=jnp.float32)
    assert jnp.allclose(out, ref_f32, atol=5e-2, rtol=5e-2), (out, ref_f32)

    print("KERNEL_OK")
</pallas_src>

<mosaic_0001>
module attributes {stable_mosaic.version = 11 : i64} {
  func.func @deeponet_kernel(%arg0: i32, %arg1: memref<16x128xbf16, #tpu.memory_space<vmem>>, %arg2: memref<16x128xbf16, #tpu.memory_space<vmem>>, %arg3: memref<128x128xbf16, #tpu.memory_space<vmem>>, %arg4: memref<1x128xf32, #tpu.memory_space<vmem>>, %arg5: memref<128x128xbf16, #tpu.memory_space<vmem>>, %arg6: memref<1x128xf32, #tpu.memory_space<vmem>>, %arg7: memref<128x128xbf16, #tpu.memory_space<vmem>>, %arg8: memref<1x128xf32, #tpu.memory_space<vmem>>, %arg9: memref<128x128xbf16, #tpu.memory_space<vmem>>, %arg10: memref<1x128xf32, #tpu.memory_space<vmem>>, %arg11: memref<16x1xf32, #tpu.memory_space<vmem>>) attributes {dimension_semantics = [#tpu.dimension_semantics<parallel>], iteration_bounds = array<i64: 1>, scalar_prefetch = 0 : i64, scratch_operands = 0 : i64, tpu.core_type = #tpu.core_type<tc>, window_params = [{transform_indices = @transform_0, window_bounds = array<i64: 16, 128>}, {transform_indices = @transform_1, window_bounds = array<i64: 16, 128>}, {pipeline_mode = #tpu.pipeline_mode<synchronous>, transform_indices = @transform_2, window_bounds = array<i64: 128, 128>}, {pipeline_mode = #tpu.pipeline_mode<synchronous>, transform_indices = @transform_3, window_bounds = array<i64: 1, 128>}, {pipeline_mode = #tpu.pipeline_mode<synchronous>, transform_indices = @transform_4, window_bounds = array<i64: 128, 128>}, {pipeline_mode = #tpu.pipeline_mode<synchronous>, transform_indices = @transform_5, window_bounds = array<i64: 1, 128>}, {pipeline_mode = #tpu.pipeline_mode<synchronous>, transform_indices = @transform_6, window_bounds = array<i64: 128, 128>}, {pipeline_mode = #tpu.pipeline_mode<synchronous>, transform_indices = @transform_7, window_bounds = array<i64: 1, 128>}, {pipeline_mode = #tpu.pipeline_mode<synchronous>, transform_indices = @transform_8, window_bounds = array<i64: 128, 128>}, {pipeline_mode = #tpu.pipeline_mode<synchronous>, transform_indices = @transform_9, window_bounds = array<i64: 1, 128>}, {transform_indices = @transform_10, window_bounds = array<i64: 16, 1>}]} {
    %c0 = arith.constant 0 : index
    %c0_0 = arith.constant 0 : index
    %0 = vector.load %arg1[%c0, %c0_0] : memref<16x128xbf16, #tpu.memory_space<vmem>>, vector<16x128xbf16>
    %c0_1 = arith.constant 0 : index
    %c0_2 = arith.constant 0 : index
    %1 = vector.load %arg3[%c0_1, %c0_2] : memref<128x128xbf16, #tpu.memory_space<vmem>>, vector<128x128xbf16>
    %cst = arith.constant dense<0.000000e+00> : vector<16x128xf32>
    %2 = tpu.matmul %0, %1, %cst {dimension_numbers = #tpu.dot_dimension_numbers<[1], [0], [0], [1], [0, 0, 1, 1], [], []>} : vector<16x128xbf16>, vector<128x128xbf16>, vector<16x128xf32> -> vector<16x128xf32>
    %c0_3 = arith.constant 0 : index
    %c0_4 = arith.constant 0 : index
    %3 = vector.load %arg4[%c0_3, %c0_4] : memref<1x128xf32, #tpu.memory_space<vmem>>, vector<1x128xf32>
    %4 = vector.broadcast %3 : vector<1x128xf32> to vector<16x128xf32>
    %5 = arith.addf %2, %4 : vector<16x128xf32>
    %6 = math.tanh %5 : vector<16x128xf32>
    %7 = arith.truncf %6 : vector<16x128xf32> to vector<16x128xbf16>
    %c0_5 = arith.constant 0 : index
    %c0_6 = arith.constant 0 : index
    %8 = vector.load %arg5[%c0_5, %c0_6] : memref<128x128xbf16, #tpu.memory_space<vmem>>, vector<128x128xbf16>
    %cst_7 = arith.constant dense<0.000000e+00> : vector<16x128xf32>
    %9 = tpu.matmul %7, %8, %cst_7 {dimension_numbers = #tpu.dot_dimension_numbers<[1], [0], [0], [1], [0, 0, 1, 1], [], []>} : vector<16x128xbf16>, vector<128x128xbf16>, vector<16x128xf32> -> vector<16x128xf32>
    %c0_8 = arith.constant 0 : index
    %c0_9 = arith.constant 0 : index
    %10 = vector.load %arg6[%c0_8, %c0_9] : memref<1x128xf32, #tpu.memory_space<vmem>>, vector<1x128xf32>
    %11 = vector.broadcast %10 : vector<1x128xf32> to vector<16x128xf32>
    %12 = arith.addf %9, %11 : vector<16x128xf32>
    %c0_10 = arith.constant 0 : index
    %c0_11 = arith.constant 0 : index
    %13 = vector.load %arg2[%c0_10, %c0_11] : memref<16x128xbf16, #tpu.memory_space<vmem>>, vector<16x128xbf16>
    %c0_12 = arith.constant 0 : index
    %c0_13 = arith.constant 0 : index
    %14 = vector.load %arg7[%c0_12, %c0_13] : memref<128x128xbf16, #tpu.memory_space<vmem>>, vector<128x128xbf16>
    %cst_14 = arith.constant dense<0.000000e+00> : vector<16x128xf32>
    %15 = tpu.matmul %13, %14, %cst_14 {dimension_numbers = #tpu.dot_dimension_numbers<[1], [0], [0], [1], [0, 0, 1, 1], [], []>} : vector<16x128xbf16>, vector<128x128xbf16>, vector<16x128xf32> -> vector<16x128xf32>
    %c0_15 = arith.constant 0 : index
    %c0_16 = arith.constant 0 : index
    %16 = vector.load %arg8[%c0_15, %c0_16] : memref<1x128xf32, #tpu.memory_space<vmem>>, vector<1x128xf32>
    %17 = vector.broadcast %16 : vector<1x128xf32> to vector<16x128xf32>
    %18 = arith.addf %15, %17 : vector<16x128xf32>
    %19 = math.tanh %18 : vector<16x128xf32>
    %20 = arith.truncf %19 : vector<16x128xf32> to vector<16x128xbf16>
    %c0_17 = arith.constant 0 : index
    %c0_18 = arith.constant 0 : index
    %21 = vector.load %arg9[%c0_17, %c0_18] : memref<128x128xbf16, #tpu.memory_space<vmem>>, vector<128x128xbf16>
    %cst_19 = arith.constant dense<0.000000e+00> : vector<16x128xf32>
    %22 = tpu.matmul %20, %21, %cst_19 {dimension_numbers = #tpu.dot_dimension_numbers<[1], [0], [0], [1], [0, 0, 1, 1], [], []>} : vector<16x128xbf16>, vector<128x128xbf16>, vector<16x128xf32> -> vector<16x128xf32>
    %c0_20 = arith.constant 0 : index
    %c0_21 = arith.constant 0 : index
    %23 = vector.load %arg10[%c0_20, %c0_21] : memref<1x128xf32, #tpu.memory_space<vmem>>, vector<1x128xf32>
    %24 = vector.broadcast %23 : vector<1x128xf32> to vector<16x128xf32>
    %25 = arith.addf %22, %24 : vector<16x128xf32>
    %26 = arith.mulf %12, %25 : vector<16x128xf32>
    %cst_22 = arith.constant dense<0.000000e+00> : vector<16xf32>
    %27 = vector.multi_reduction <add>, %26, %cst_22 [1] : vector<16x128xf32> to vector<16xf32>
    %28 = vector.shape_cast %27 : vector<16xf32> to vector<16x1xf32>
    %c0_23 = arith.constant 0 : index
    %c0_24 = arith.constant 0 : index
    %29 = vector.load %arg11[%c0_23, %c0_24] : memref<16x1xf32, #tpu.memory_space<vmem>>, vector<16x1xf32>
    tpu.vector_store %arg11[%c0_23, %c0_24], %28 {strides = array<i32>} : memref<16x1xf32, #tpu.memory_space<vmem>>, vector<16x1xf32>,
    return
  }
  func.func @transform_0(%arg0: i32) -> (i32, i32) {
    %c0_i32 = arith.constant 0 : i32
    %c0_i32_0 = arith.constant 0 : i32
    return %arg0, %c0_i32 : i32, i32
  }
  func.func @transform_1(%arg0: i32) -> (i32, i32) {
    %c0_i32 = arith.constant 0 : i32
    %c0_i32_0 = arith.constant 0 : i32
    return %arg0, %c0_i32 : i32, i32
  }
  func.func @transform_2(%arg0: i32) -> (i32, i32) {
    %c0_i32 = arith.constant 0 : i32
    %c0_i32_0 = arith.constant 0 : i32
    %c0_i32_1 = arith.constant 0 : i32
    return %c0_i32, %c0_i32_0 : i32, i32
  }
  func.func @transform_3(%arg0: i32) -> (i32, i32) {
    %c0_i32 = arith.constant 0 : i32
    %c0_i32_0 = arith.constant 0 : i32
    %c0_i32_1 = arith.constant 0 : i32
    return %c0_i32, %c0_i32_0 : i32, i32
  }
  func.func @transform_4(%arg0: i32) -> (i32, i32) {
    %c0_i32 = arith.constant 0 : i32
    %c0_i32_0 = arith.constant 0 : i32
    %c0_i32_1 = arith.constant 0 : i32
    return %c0_i32, %c0_i32_0 : i32, i32
  }
  func.func @transform_5(%arg0: i32) -> (i32, i32) {
    %c0_i32 = arith.constant 0 : i32
    %c0_i32_0 = arith.constant 0 : i32
    %c0_i32_1 = arith.constant 0 : i32
    return %c0_i32, %c0_i32_0 : i32, i32
  }
  func.func @transform_6(%arg0: i32) -> (i32, i32) {
    %c0_i32 = arith.constant 0 : i32
    %c0_i32_0 = arith.constant 0 : i32
    %c0_i32_1 = arith.constant 0 : i32
    return %c0_i32, %c0_i32_0 : i32, i32
  }
  func.func @transform_7(%arg0: i32) -> (i32, i32) {
    %c0_i32 = arith.constant 0 : i32
    %c0_i32_0 = arith.constant 0 : i32
    %c0_i32_1 = arith.constant 0 : i32
    return %c0_i32, %c0_i32_0 : i32, i32
  }
  func.func @transform_8(%arg0: i32) -> (i32, i32) {
    %c0_i32 = arith.constant 0 : i32
    %c0_i32_0 = arith.constant 0 : i32
    %c0_i32_1 = arith.constant 0 : i32
    return %c0_i32, %c0_i32_0 : i32, i32
  }
  func.func @transform_9(%arg0: i32) -> (i32, i32) {
    %c0_i32 = arith.constant 0 : i32
    %c0_i32_0 = arith.constant 0 : i32
    %c0_i32_1 = arith.constant 0 : i32
    return %c0_i32, %c0_i32_0 : i32, i32
  }
  func.func @transform_10(%arg0: i32) -> (i32, i32) {
    %c0_i32 = arith.constant 0 : i32
    %c0_i32_0 = arith.constant 0 : i32
    return %arg0, %c0_i32 : i32, i32
  }
}

</mosaic_0001>

<llo_original>
// kernel: tpu_custom_call.1
$region0: #{tpu_custom_call.1}
  #allocation0 [shape = 'u32[]', space=smem, size = 0x4, offset = 0x4, fixed_abs, tag = 'smem constant byte address 0x4 - core index']
  #allocation1 [shape = 'u32[144,128]{1,0:T(1,128)}', space=vmem, size = 0x12000, scoped, tag = 'internal scratch']
  %s0 = inlined_call_operand.hbm [shape: bf16[16,128], index: 0, kind: input, shape index: {}]
  %s1 = inlined_call_operand.hbm [shape: bf16[16,128], index: 1, kind: input, shape index: {}]
  %s2 = inlined_call_operand.hbm [shape: bf16[128,128], index: 2, kind: input, shape index: {}]
  %s3 = inlined_call_operand.vmem [shape: f32[1,128], index: 3, kind: input, shape index: {}]
  %s4 = inlined_call_operand.hbm [shape: bf16[128,128], index: 4, kind: input, shape index: {}]
  %s5 = inlined_call_operand.vmem [shape: f32[1,128], index: 5, kind: input, shape index: {}]
  %s6 = inlined_call_operand.hbm [shape: bf16[128,128], index: 6, kind: input, shape index: {}]
  %s7 = inlined_call_operand.vmem [shape: f32[1,128], index: 7, kind: input, shape index: {}]
  %s8 = inlined_call_operand.hbm [shape: bf16[128,128], index: 8, kind: input, shape index: {}]
  %s9 = inlined_call_operand.vmem [shape: f32[1,128], index: 9, kind: input, shape index: {}]
  %s10 = inlined_call_operand.vmem [shape: f32[16,1], index: 10, kind: output, shape index: {}]
  %s11 = sld [smem:[#allocation0]]
  $region74: #{tpu_custom_call.1} parent=0
    _
  %s13 = ssub.s32 1, %s11
  %s14 = scalar_select 0, %s13, %s11
  $region1: #{tpu_custom_call.1} parent=0
    #allocation2 [shape = 'u8[4096]{0}', space=vmem, size = 0x1000, scoped, tag = 'input window, operand 0, single buffered']
    #allocation3 [shape = 's32[1]{0}', space=sflag, size = 0x4, scoped, tag = 'scoped memory for tpu_custom_call.1']
    #allocation4 [shape = 'u8[4096]{0}', space=vmem, size = 0x1000, scoped, tag = 'input window, operand 1, single buffered']
    #allocation5 [shape = 's32[1]{0}', space=sflag, size = 0x4, scoped, tag = 'scoped memory for tpu_custom_call.1']
    #allocation6 [shape = 'u8[32768]{0}', space=vmem, size = 0x8000, scoped, tag = 'input window, operand 2, single buffered']
    #allocation7 [shape = 'u8[32768]{0}', space=vmem, size = 0x8000, scoped, tag = 'input window, operand 4, single buffered']
    #allocation8 [shape = 's32[1]{0}', space=sflag, size = 0x4, scoped, tag = 'scoped memory for tpu_custom_call.1']
    #allocation9 [shape = 'u8[32768]{0}', space=vmem, size = 0x8000, scoped, tag = 'input window, operand 6, single buffered']
    #allocation10 [shape = 'u8[32768]{0}', space=vmem, size = 0x8000, scoped, tag = 'input window, operand 8, single buffered']
    #allocation11 [shape = 's32[1]{0}', space=sflag, size = 0x4, scoped, tag = 'scoped memory for tpu_custom_call.1']
    %15 = vsyncpa [#allocation3], 0
    %16 = vsyncpa [#allocation5], 0
    %17 = vsyncpa [#allocation8], 0
    %18 = vsyncpa [#allocation11], 0
    // Predicated region
    $region2: #{tpu_custom_call.1} parent=1 // pred_check
      _
    $region3: #{tpu_custom_call.1} parent=1 // pred_check_branch
      %20 = sbr.rel (0) target = $region5
    $region4: #{tpu_custom_call.1} parent=1 // pred_region
      %s22 = ssub.s32 128, 128
      %23 = vsyncadd [#allocation3], %s22
      %s24 = sshll.u32 [#allocation2], 4
      %s25 = int_to_ptr.vmem [resolvable:$true] %s24
      %30 = dma.hbm_to_vmem [thread:$0]  %s0, 128, %s25, [#allocation3], 64, 64, 4
    $region5: #{tpu_custom_call.1} parent=1 // pred_fallthru
      _
    // Predicated region
    $region6: #{tpu_custom_call.1} parent=1 // pred_check
      _
    $region7: #{tpu_custom_call.1} parent=1 // pred_check_branch
      %32 = sbr.rel (0) target = $region9
    $region8: #{tpu_custom_call.1} parent=1 // pred_region
      %s34 = ssub.s32 128, 128
      %35 = vsyncadd [#allocation5], %s34
      %s36 = sshll.u32 [#allocation4], 4
      %s37 = int_to_ptr.vmem [resolvable:$true] %s36
      %42 = dma.hbm_to_vmem [thread:$0]  %s1, 128, %s37, [#allocation5], 64, 64, 4
    $region9: #{tpu_custom_call.1} parent=1 // pred_fallthru
      _
    // Predicated region
    $region10: #{tpu_custom_call.1} parent=1 // pred_check
      _
    $region11: #{tpu_custom_call.1} parent=1 // pred_check_branch
      %44 = sbr.rel (0) target = $region13
    $region12: #{tpu_custom_call.1} parent=1 // pred_region
      %s46 = ssub.s32 1024, 1024
      %47 = vsyncadd [#allocation5], %s46
      %s48 = sshll.u32 [#allocation6], 4
      %s49 = int_to_ptr.vmem [resolvable:$true] %s48
      %54 = dma.hbm_to_vmem [thread:$0]  %s2, 1024, %s49, [#allocation5], 64, 64, 4
    $region13: #{tpu_custom_call.1} parent=1 // pred_fallthru
      _
    // Predicated region
    $region14: #{tpu_custom_call.1} parent=1 // pred_check
      _
    $region15: #{tpu_custom_call.1} parent=1 // pred_check_branch
      %56 = sbr.rel (0) target = $region17
    $region16: #{tpu_custom_call.1} parent=1 // pred_region
      _
    $region17: #{tpu_custom_call.1} parent=1 // pred_fallthru
      _
    // Predicated region
    $region18: #{tpu_custom_call.1} parent=1 // pred_check
      _
    $region19: #{tpu_custom_call.1} parent=1 // pred_check_branch
      %58 = sbr.rel (0) target = $region21
    $region20: #{tpu_custom_call.1} parent=1 // pred_region
      %s60 = ssub.s32 1024, 1024
      %61 = vsyncadd [#allocation8], %s60
      %s62 = sshll.u32 [#allocation7], 4
      %s63 = int_to_ptr.vmem [resolvable:$true] %s62
      %68 = dma.hbm_to_vmem [thread:$0]  %s4, 1024, %s63, [#allocation8], 64, 64, 4
    $region21: #{tpu_custom_call.1} parent=1 // pred_fallthru
      _
    // Predicated region
    $region22: #{tpu_custom_call.1} parent=1 // pred_check
      _
    $region23: #{tpu_custom_call.1} parent=1 // pred_check_branch
      %70 = sbr.rel (0) target = $region25
    $region24: #{tpu_custom_call.1} parent=1 // pred_region
      _
    $region25: #{tpu_custom_call.1} parent=1 // pred_fallthru
      _
    // Predicated region
    $region26: #{tpu_custom_call.1} parent=1 // pred_check
      _
    $region27: #{tpu_custom_call.1} parent=1 // pred_check_branch
      %72 = sbr.rel (0) target = $region29
    $region28: #{tpu_custom_call.1} parent=1 // pred_region
      %s74 = ssub.s32 1024, 1024
      %75 = vsyncadd [#allocation8], %s74
      %s76 = sshll.u32 [#allocation9], 4
      %s77 = int_to_ptr.vmem [resolvable:$true] %s76
      %82 = dma.hbm_to_vmem [thread:$0]  %s6, 1024, %s77, [#allocation8], 64, 64, 4
    $region29: #{tpu_custom_call.1} parent=1 // pred_fallthru
      _
    // Predicated region
    $region30: #{tpu_custom_call.1} parent=1 // pred_check
      _
    $region31: #{tpu_custom_call.1} parent=1 // pred_check_branch
      %84 = sbr.rel (0) target = $region33
    $region32: #{tpu_custom_call.1} parent=1 // pred_region
      _
    $region33: #{tpu_custom_call.1} parent=1 // pred_fallthru
      _
    // Predicated region
    $region34: #{tpu_custom_call.1} parent=1 // pred_check
      _
    $region35: #{tpu_custom_call.1} parent=1 // pred_check_branch
      %86 = sbr.rel (0) target = $region37
    $region36: #{tpu_custom_call.1} parent=1 // pred_region
      %s88 = ssub.s32 1024, 1024
      %89 = vsyncadd [#allocation11], %s88
      %s90 = sshll.u32 [#allocation10], 4
      %s91 = int_to_ptr.vmem [resolvable:$true] %s90
      %96 = dma.hbm_to_vmem [thread:$0]  %s8, 1024, %s91, [#allocation11], 64, 64, 4
    $region37: #{tpu_custom_call.1} parent=1 // pred_fallthru
      _
    // Predicated region
    $region38: #{tpu_custom_call.1} parent=1 // pred_check
      _
    $region39: #{tpu_custom_call.1} parent=1 // pred_check_branch
      %98 = sbr.rel (0) target = $region41
    $region40: #{tpu_custom_call.1} parent=1 // pred_region
      _
    $region41: #{tpu_custom_call.1} parent=1 // pred_fallthru
      _
    // Predicated region
    $region42: #{tpu_custom_call.1} parent=1 // pred_check
      _
    $region43: #{tpu_custom_call.1} parent=1 // pred_check_branch
      %100 = sbr.rel (0) target = $region45
    $region44: #{tpu_custom_call.1} parent=1 // pred_region
      %101 = dma.done [#allocation3], 128
    $region45: #{tpu_custom_call.1} parent=1 // pred_fallthru
      _
    // Predicated region
    $region46: #{tpu_custom_call.1} parent=1 // pred_check
      _
    $region47: #{tpu_custom_call.1} parent=1 // pred_check_branch
      %103 = sbr.rel (0) target = $region49
    $region48: #{tpu_custom_call.1} parent=1 // pred_region
      %104 = dma.done [#allocation5], 128
    $region49: #{tpu_custom_call.1} parent=1 // pred_fallthru
      _
    // Predicated region
    $region50: #{tpu_custom_call.1} parent=1 // pred_check
      _
    $region51: #{tpu_custom_call.1} parent=1 // pred_check_branch
      %106 = sbr.rel (0) target = $region53
    $region52: #{tpu_custom_call.1} parent=1 // pred_region
      %107 = dma.done [#allocation5], 1024
    $region53: #{tpu_custom_call.1} parent=1 // pred_fallthru
      _
    // Predicated region
    $region54: #{tpu_custom_call.1} parent=1 // pred_check
      _
    $region55: #{tpu_custom_call.1} parent=1 // pred_check_branch
      %109 = sbr.rel (0) target = $region57
    $region56: #{tpu_custom_call.1} parent=1 // pred_region
      %110 = dma.done [#allocation8], 1024
    $region57: #{tpu_custom_call.1} parent=1 // pred_fallthru
      _
    // Predicated region
    $region58: #{tpu_custom_call.1} parent=1 // pred_check
      _
    $region59: #{tpu_custom_call.1} parent=1 // pred_check_branch
      %112 = sbr.rel (0) target = $region61
    $region60: #{tpu_custom_call.1} parent=1 // pred_region
      %113 = dma.done [#allocation8], 1024
    $region61: #{tpu_custom_call.1} parent=1 // pred_fallthru
      _
    // Predicated region
    $region62: #{tpu_custom_call.1} parent=1 // pred_check
      _
    $region63: #{tpu_custom_call.1} parent=1 // pred_check_branch
      %115 = sbr.rel (0) target = $region65
    $region64: #{tpu_custom_call.1} parent=1 // pred_region
      %116 = dma.done [#allocation11], 1024
    $region65: #{tpu_custom_call.1} parent=1 // pred_fallthru
      _
    %v118 = vld [vmem:[#allocation2] sm:$0xf]
    %v119 = vld [vmem:[#allocation2 + $0x4] sm:$0xf]
    %v120 = vld [vmem:[#allocation6] sm:$0xf]
    %v121 = vld [vmem:[#allocation6 + $0x4] sm:$0xf]
    %v122 = vld [vmem:[#allocation6 + $0x8] sm:$0xf]
    %v123 = vld [vmem:[#allocation6 + $0xc] sm:$0xf]
    %v124 = vld [vmem:[#allocation6 + $0x10] sm:$0xf]
    %v125 = vld [vmem:[#allocation6 + $0x14] sm:$0xf]
    %v126 = vld [vmem:[#allocation6 + $0x18] sm:$0xf]
    %v127 = vld [vmem:[#allocation6 + $0x1c] sm:$0xf]
    %v128 = vld [vmem:[#allocation6 + $0x20] sm:$0xf]
    %v129 = vld [vmem:[#allocation6 + $0x24] sm:$0xf]
    %v130 = vld [vmem:[#allocation6 + $0x28] sm:$0xf]
    %v131 = vld [vmem:[#allocation6 + $0x2c] sm:$0xf]
    %v132 = vld [vmem:[#allocation6 + $0x30] sm:$0xf]
    %v133 = vld [vmem:[#allocation6 + $0x34] sm:$0xf]
    %v134 = vld [vmem:[#allocation6 + $0x38] sm:$0xf]
    %v135 = vld [vmem:[#allocation6 + $0x3c] sm:$0xf]
    %v136 = vld [vmem:[%s3] sm:$0x1]
    %v138 = vlaneseq
    %v139 = vshrl.u32 %v138, 7
    %v140 = vsub.s32 0, %v139
    %v141 = vrot.slane %v136, %v140
    %v145 = vunpack.c.l.b16 %v118
    %v146 = vunpack.c.l.b16 %v119
    %v147 = vpack.c.b16 %v146, %v145
    %v165 = vunpack.c.l.b16 %v120
    %v166 = vunpack.c.l.b16 %v121
    %v167 = vunpack.c.l.b16 %v122
    %v168 = vunpack.c.l.b16 %v123
    %v169 = vunpack.c.l.b16 %v124
    %v170 = vunpack.c.l.b16 %v125
    %v171 = vunpack.c.l.b16 %v126
    %v172 = vunpack.c.l.b16 %v127
    %v173 = vunpack.c.l.b16 %v128
    %v174 = vunpack.c.l.b16 %v129
    %v175 = vunpack.c.l.b16 %v130
    %v176 = vunpack.c.l.b16 %v131
    %v177 = vunpack.c.l.b16 %v132
    %v178 = vunpack.c.l.b16 %v133
    %v179 = vunpack.c.l.b16 %v134
    %v180 = vunpack.c.l.b16 %v135
    %v181 = vpack.c.b16 %v166, %v165
    %v182 = vpack.c.b16 %v168, %v167
    %v183 = vpack.c.b16 %v170, %v169
    %v184 = vpack.c.b16 %v172, %v171
    %v185 = vpack.c.b16 %v174, %v173
    %v186 = vpack.c.b16 %v176, %v175
    %v187 = vpack.c.b16 %v178, %v177
    %v188 = vpack.c.b16 %v180, %v179
    %197 = vmatprep.subr.bf16.mxu0 0
    %198 = vmatpush1.bf16.msra.mxu0 %v181
    %199 = vmatprep.subr.bf16.mxu0 0
    %200 = vmatpush1.bf16.msra.mxu0 %v182
    %201 = vmatprep.subr.bf16.mxu0 0
    %202 = vmatpush1.bf16.msra.mxu0 %v183
    %203 = vmatprep.subr.bf16.mxu0 0
    %204 = vmatpush1.bf16.msra.mxu0 %v184
    %205 = vmatprep.subr.bf16.mxu0 0
    %206 = vmatpush1.bf16.msra.mxu0 %v185
    %207 = vmatprep.subr.bf16.mxu0 0
    %208 = vmatpush1.bf16.msra.mxu0 %v186
    %209 = vmatprep.subr.bf16.mxu0 0
    %210 = vmatpush1.bf16.msra.mxu0 %v187
    %211 = vmatprep.subr.bf16.mxu0 0
    %212 = vmatpush1.bf16.msra.mxu0 %v188
    %213 = vmatprep.subr.bf16.mxu0 0
    %214 = vmatpush1.bf16.msra.mxu0 0
    %215 = vmatprep.subr.bf16.mxu0 0
    %216 = vmatpush1.bf16.msra.mxu0 0
    %217 = vmatprep.subr.bf16.mxu0 0
    %218 = vmatpush1.bf16.msra.mxu0 0
    %219 = vmatprep.subr.bf16.mxu0 0
    %220 = vmatpush1.bf16.msra.mxu0 0
    %221 = vmatprep.subr.bf16.mxu0 0
    %222 = vmatpush1.bf16.msra.mxu0 0
    %223 = vmatprep.subr.bf16.mxu0 0
    %224 = vmatpush1.bf16.msra.mxu0 0
    %225 = vmatprep.subr.bf16.mxu0 0
    %226 = vmatpush1.bf16.msra.mxu0 0
    %227 = vmatprep.subr.bf16.mxu0 0
    %228 = vmatpush1.bf16.msra.mxu0 0
    %229 = vmatprep.mubr.bf16.mxu0 0
    %230 = vmatmul.mubr.bf16.gmra.mrb[0].mxu0 %v147
    %v231 = vpop.f32.mrb[0].mxu0
    %v232 = vadd.f32 %v141, %v231
    %v233 = vpop.f32.mrb[0].mxu0
    %v234 = vpop.f32.mrb[0].mxu0
    %v235 = vadd.f32 %v141, %v234
    %v236 = vpop.f32.mrb[0].mxu0
    %237 = vdwg.mxu0
    %v238 = vtanh.pop %v232
    %v239 = vtanh.pop %v235
    %v240 = vpack.c.bf16 %v239, %v238
    %v241 = vld [vmem:[#allocation7] sm:$0xf]
    %v242 = vld [vmem:[#allocation7 + $0x4] sm:$0xf]
    %v243 = vld [vmem:[#allocation7 + $0x8] sm:$0xf]
    %v244 = vld [vmem:[#allocation7 + $0xc] sm:$0xf]
    %v245 = vld [vmem:[#allocation7 + $0x10] sm:$0xf]
    %v246 = vld [vmem:[#allocation7 + $0x14] sm:$0xf]
    %v247 = vld [vmem:[#allocation7 + $0x18] sm:$0xf]
    %v248 = vld [vmem:[#allocation7 + $0x1c] sm:$0xf]
    %v249 = vld [vmem:[#allocation7 + $0x20] sm:$0xf]
    %v250 = vld [vmem:[#allocation7 + $0x24] sm:$0xf]
    %v251 = vld [vmem:[#allocation7 + $0x28] sm:$0xf]
    %v252 = vld [vmem:[#allocation7 + $0x2c] sm:$0xf]
    %v253 = vld [vmem:[#allocation7 + $0x30] sm:$0xf]
    %v254 = vld [vmem:[#allocation7 + $0x34] sm:$0xf]
    %v255 = vld [vmem:[#allocation7 + $0x38] sm:$0xf]
    %v256 = vld [vmem:[#allocation7 + $0x3c] sm:$0xf]
    %v257 = vld [vmem:[%s5] sm:$0x1]
    %v259 = vlaneseq
    %v260 = vshrl.u32 %v259, 7
    %v261 = vsub.s32 0, %v260
    %v262 = vrot.slane %v257, %v261
    %v280 = vunpack.c.l.b16 %v241
    %v281 = vunpack.c.l.b16 %v242
    %v282 = vunpack.c.l.b16 %v243
    %v283 = vunpack.c.l.b16 %v244
    %v284 = vunpack.c.l.b16 %v245
    %v285 = vunpack.c.l.b16 %v246
    %v286 = vunpack.c.l.b16 %v247
    %v287 = vunpack.c.l.b16 %v248
    %v288 = vunpack.c.l.b16 %v249
    %v289 = vunpack.c.l.b16 %v250
    %v290 = vunpack.c.l.b16 %v251
    %v291 = vunpack.c.l.b16 %v252
    %v292 = vunpack.c.l.b16 %v253
    %v293 = vunpack.c.l.b16 %v254
    %v294 = vunpack.c.l.b16 %v255
    %v295 = vunpack.c.l.b16 %v256
    %v296 = vpack.c.b16 %v281, %v280
    %v297 = vpack.c.b16 %v283, %v282
    %v298 = vpack.c.b16 %v285, %v284
    %v299 = vpack.c.b16 %v287, %v286
    %v300 = vpack.c.b16 %v289, %v288
    %v301 = vpack.c.b16 %v291, %v290
    %v302 = vpack.c.b16 %v293, %v292
    %v303 = vpack.c.b16 %v295, %v294
    %312 = vmatprep.subr.bf16.mxu0 0
    %313 = vmatpush1.bf16.msra.mxu0 %v296
    %314 = vmatprep.subr.bf16.mxu0 0
    %315 = vmatpush1.bf16.msra.mxu0 %v297
    %316 = vmatprep.subr.bf16.mxu0 0
    %317 = vmatpush1.bf16.msra.mxu0 %v298
    %318 = vmatprep.subr.bf16.mxu0 0
    %319 = vmatpush1.bf16.msra.mxu0 %v299
    %320 = vmatprep.subr.bf16.mxu0 0
    %321 = vmatpush1.bf16.msra.mxu0 %v300
    %322 = vmatprep.subr.bf16.mxu0 0
    %323 = vmatpush1.bf16.msra.mxu0 %v301
    %324 = vmatprep.subr.bf16.mxu0 0
    %325 = vmatpush1.bf16.msra.mxu0 %v302
    %326 = vmatprep.subr.bf16.mxu0 0
    %327 = vmatpush1.bf16.msra.mxu0 %v303
    %328 = vmatprep.subr.bf16.mxu0 0
    %329 = vmatpush1.bf16.msra.mxu0 0
    %330 = vmatprep.subr.bf16.mxu0 0
    %331 = vmatpush1.bf16.msra.mxu0 0
    %332 = vmatprep.subr.bf16.mxu0 0
    %333 = vmatpush1.bf16.msra.mxu0 0
    %334 = vmatprep.subr.bf16.mxu0 0
    %335 = vmatpush1.bf16.msra.mxu0 0
    %336 = vmatprep.subr.bf16.mxu0 0
    %337 = vmatpush1.bf16.msra.mxu0 0
    %338 = vmatprep.subr.bf16.mxu0 0
    %339 = vmatpush1.bf16.msra.mxu0 0
    %340 = vmatprep.subr.bf16.mxu0 0
    %341 = vmatpush1.bf16.msra.mxu0 0
    %342 = vmatprep.subr.bf16.mxu0 0
    %343 = vmatpush1.bf16.msra.mxu0 0
    %344 = vmatprep.mubr.bf16.mxu0 0
    %345 = vmatmul.mubr.bf16.gmra.mrb[0].mxu0 %v240
    %v346 = vpop.f32.mrb[0].mxu0
    %v347 = vadd.f32 %v262, %v346
    %v348 = vpop.f32.mrb[0].mxu0
    %v349 = vpop.f32.mrb[0].mxu0
    %v350 = vadd.f32 %v262, %v349
    %v351 = vpop.f32.mrb[0].mxu0
    %352 = vdwg.mxu0
    %v353 = vld [vmem:[#allocation4] sm:$0xf]
    %v354 = vld [vmem:[#allocation4 + $0x4] sm:$0xf]
    %v355 = vld [vmem:[#allocation9] sm:$0xf]
    %v356 = vld [vmem:[#allocation9 + $0x4] sm:$0xf]
    %v357 = vld [vmem:[#allocation9 + $0x8] sm:$0xf]
    %v358 = vld [vmem:[#allocation9 + $0xc] sm:$0xf]
    %v359 = vld [vmem:[#allocation9 + $0x10] sm:$0xf]
    %v360 = vld [vmem:[#allocation9 + $0x14] sm:$0xf]
    %v361 = vld [vmem:[#allocation9 + $0x18] sm:$0xf]
    %v362 = vld [vmem:[#allocation9 + $0x1c] sm:$0xf]
    %v363 = vld [vmem:[#allocation9 + $0x20] sm:$0xf]
    %v364 = vld [vmem:[#allocation9 + $0x24] sm:$0xf]
    %v365 = vld [vmem:[#allocation9 + $0x28] sm:$0xf]
    %v366 = vld [vmem:[#allocation9 + $0x2c] sm:$0xf]
    %v367 = vld [vmem:[#allocation9 + $0x30] sm:$0xf]
    %v368 = vld [vmem:[#allocation9 + $0x34] sm:$0xf]
    %v369 = vld [vmem:[#allocation9 + $0x38] sm:$0xf]
    %v370 = vld [vmem:[#allocation9 + $0x3c] sm:$0xf]
    %v371 = vld [vmem:[%s7] sm:$0x1]
    %v373 = vlaneseq
    %v374 = vshrl.u32 %v373, 7
    %v375 = vsub.s32 0, %v374
    %v376 = vrot.slane %v371, %v375
    %v380 = vunpack.c.l.b16 %v353
    %v381 = vunpack.c.l.b16 %v354
    %v382 = vpack.c.b16 %v381, %v380
    %v400 = vunpack.c.l.b16 %v355
    %v401 = vunpack.c.l.b16 %v356
    %v402 = vunpack.c.l.b16 %v357
    %v403 = vunpack.c.l.b16 %v358
    %v404 = vunpack.c.l.b16 %v359
    %v405 = vunpack.c.l.b16 %v360
    %v406 = vunpack.c.l.b16 %v361
    %v407 = vunpack.c.l.b16 %v362
    %v408 = vunpack.c.l.b16 %v363
    %v409 = vunpack.c.l.b16 %v364
    %v410 = vunpack.c.l.b16 %v365
    %v411 = vunpack.c.l.b16 %v366
    %v412 = vunpack.c.l.b16 %v367
    %v413 = vunpack.c.l.b16 %v368
    %v414 = vunpack.c.l.b16 %v369
    %v415 = vunpack.c.l.b16 %v370
    %v416 = vpack.c.b16 %v401, %v400
    %v417 = vpack.c.b16 %v403, %v402
    %v418 = vpack.c.b16 %v405, %v404
    %v419 = vpack.c.b16 %v407, %v406
    %v420 = vpack.c.b16 %v409, %v408
    %v421 = vpack.c.b16 %v411, %v410
    %v422 = vpack.c.b16 %v413, %v412
    %v423 = vpack.c.b16 %v415, %v414
    %432 = vmatprep.subr.bf16.mxu0 0
    %433 = vmatpush1.bf16.msra.mxu0 %v416
    %434 = vmatprep.subr.bf16.mxu0 0
    %435 = vmatpush1.bf16.msra.mxu0 %v417
    %436 = vmatprep.subr.bf16.mxu0 0
    %437 = vmatpush1.bf16.msra.mxu0 %v418
    %438 = vmatprep.subr.bf16.mxu0 0
    %439 = vmatpush1.bf16.msra.mxu0 %v419
    %440 = vmatprep.subr.bf16.mxu0 0
    %441 = vmatpush1.bf16.msra.mxu0 %v420
    %442 = vmatprep.subr.bf16.mxu0 0
    %443 = vmatpush1.bf16.msra.mxu0 %v421
    %444 = vmatprep.subr.bf16.mxu0 0
    %445 = vmatpush1.bf16.msra.mxu0 %v422
    %446 = vmatprep.subr.bf16.mxu0 0
    %447 = vmatpush1.bf16.msra.mxu0 %v423
    %448 = vmatprep.subr.bf16.mxu0 0
    %449 = vmatpush1.bf16.msra.mxu0 0
    %450 = vmatprep.subr.bf16.mxu0 0
    %451 = vmatpush1.bf16.msra.mxu0 0
    %452 = vmatprep.subr.bf16.mxu0 0
    %453 = vmatpush1.bf16.msra.mxu0 0
    %454 = vmatprep.subr.bf16.mxu0 0
    %455 = vmatpush1.bf16.msra.mxu0 0
    %456 = vmatprep.subr.bf16.mxu0 0
    %457 = vmatpush1.bf16.msra.mxu0 0
    %458 = vmatprep.subr.bf16.mxu0 0
    %459 = vmatpush1.bf16.msra.mxu0 0
    %460 = vmatprep.subr.bf16.mxu0 0
    %461 = vmatpush1.bf16.msra.mxu0 0
    %462 = vmatprep.subr.bf16.mxu0 0
    %463 = vmatpush1.bf16.msra.mxu0 0
    %464 = vmatprep.mubr.bf16.mxu0 0
    %465 = vmatmul.mubr.bf16.gmra.mrb[0].mxu0 %v382
    %v466 = vpop.f32.mrb[0].mxu0
    %v467 = vadd.f32 %v376, %v466
    %v468 = vpop.f32.mrb[0].mxu0
    %v469 = vpop.f32.mrb[0].mxu0
    %v470 = vadd.f32 %v376, %v469
    %v471 = vpop.f32.mrb[0].mxu0
    %472 = vdwg.mxu0
    %v473 = vtanh.pop %v467
    %v474 = vtanh.pop %v470
    %v475 = vpack.c.bf16 %v474, %v473
    %v476 = vld [vmem:[#allocation10] sm:$0xf]
    %v477 = vld [vmem:[#allocation10 + $0x4] sm:$0xf]
    %v478 = vld [vmem:[#allocation10 + $0x8] sm:$0xf]
    %v479 = vld [vmem:[#allocation10 + $0xc] sm:$0xf]
    %v480 = vld [vmem:[#allocation10 + $0x10] sm:$0xf]
    %v481 = vld [vmem:[#allocation10 + $0x14] sm:$0xf]
    %v482 = vld [vmem:[#allocation10 + $0x18] sm:$0xf]
    %v483 = vld [vmem:[#allocation10 + $0x1c] sm:$0xf]
    %v484 = vld [vmem:[#allocation10 + $0x20] sm:$0xf]
    %v485 = vld [vmem:[#allocation10 + $0x24] sm:$0xf]
    %v486 = vld [vmem:[#allocation10 + $0x28] sm:$0xf]
    %v487 = vld [vmem:[#allocation10 + $0x2c] sm:$0xf]
    %v488 = vld [vmem:[#allocation10 + $0x30] sm:$0xf]
    %v489 = vld [vmem:[#allocation10 + $0x34] sm:$0xf]
    %v490 = vld [vmem:[#allocation10 + $0x38] sm:$0xf]
    %v491 = vld [vmem:[#allocation10 + $0x3c] sm:$0xf]
    %v492 = vld [vmem:[%s9] sm:$0x1]
    %v494 = vlaneseq
    %v495 = vshrl.u32 %v494, 7
    %v496 = vsub.s32 0, %v495
    %v497 = vrot.slane %v492, %v496
    %v515 = vunpack.c.l.b16 %v476
    %v516 = vunpack.c.l.b16 %v477
    %v517 = vunpack.c.l.b16 %v478
    %v518 = vunpack.c.l.b16 %v479
    %v519 = vunpack.c.l.b16 %v480
    %v520 = vunpack.c.l.b16 %v481
    %v521 = vunpack.c.l.b16 %v482
    %v522 = vunpack.c.l.b16 %v483
    %v523 = vunpack.c.l.b16 %v484
    %v524 = vunpack.c.l.b16 %v485
    %v525 = vunpack.c.l.b16 %v486
    %v526 = vunpack.c.l.b16 %v487
    %v527 = vunpack.c.l.b16 %v488
    %v528 = vunpack.c.l.b16 %v489
    %v529 = vunpack.c.l.b16 %v490
    %v530 = vunpack.c.l.b16 %v491
    %v531 = vpack.c.b16 %v516, %v515
    %v532 = vpack.c.b16 %v518, %v517
    %v533 = vpack.c.b16 %v520, %v519
    %v534 = vpack.c.b16 %v522, %v521
    %v535 = vpack.c.b16 %v524, %v523
    %v536 = vpack.c.b16 %v526, %v525
    %v537 = vpack.c.b16 %v528, %v527
    %v538 = vpack.c.b16 %v530, %v529
    %547 = vmatprep.subr.bf16.mxu0 0
    %548 = vmatpush1.bf16.msra.mxu0 %v531
    %549 = vmatprep.subr.bf16.mxu0 0
    %550 = vmatpush1.bf16.msra.mxu0 %v532
    %551 = vmatprep.subr.bf16.mxu0 0
    %552 = vmatpush1.bf16.msra.mxu0 %v533
    %553 = vmatprep.subr.bf16.mxu0 0
    %554 = vmatpush1.bf16.msra.mxu0 %v534
    %555 = vmatprep.subr.bf16.mxu0 0
    %556 = vmatpush1.bf16.msra.mxu0 %v535
    %557 = vmatprep.subr.bf16.mxu0 0
    %558 = vmatpush1.bf16.msra.mxu0 %v536
    %559 = vmatprep.subr.bf16.mxu0 0
    %560 = vmatpush1.bf16.msra.mxu0 %v537
    %561 = vmatprep.subr.bf16.mxu0 0
    %562 = vmatpush1.bf16.msra.mxu0 %v538
    %563 = vmatprep.subr.bf16.mxu0 0
    %564 = vmatpush1.bf16.msra.mxu0 0
    %565 = vmatprep.subr.bf16.mxu0 0
    %566 = vmatpush1.bf16.msra.mxu0 0
    %567 = vmatprep.subr.bf16.mxu0 0
    %568 = vmatpush1.bf16.msra.mxu0 0
    %569 = vmatprep.subr.bf16.mxu0 0
    %570 = vmatpush1.bf16.msra.mxu0 0
    %571 = vmatprep.subr.bf16.mxu0 0
    %572 = vmatpush1.bf16.msra.mxu0 0
    %573 = vmatprep.subr.bf16.mxu0 0
    %574 = vmatpush1.bf16.msra.mxu0 0
    %575 = vmatprep.subr.bf16.mxu0 0
    %576 = vmatpush1.bf16.msra.mxu0 0
    %577 = vmatprep.subr.bf16.mxu0 0
    %578 = vmatpush1.bf16.msra.mxu0 0
    %579 = vmatprep.mubr.bf16.mxu0 0
    %580 = vmatmul.mubr.bf16.gmra.mrb[0].mxu0 %v475
    %v581 = vpop.f32.mrb[0].mxu0
    %v582 = vadd.f32 %v497, %v581
    %v583 = vpop.f32.mrb[0].mxu0
    %v584 = vpop.f32.mrb[0].mxu0
    %v585 = vadd.f32 %v497, %v584
    %v586 = vpop.f32.mrb[0].mxu0
    %587 = vdwg.mxu0
    %v588 = vmul.f32 %v347, %v582
    %v589 = vmul.f32 %v350, %v585
    %590 = vadd.xlane.f32.xlu0 %v588
    %v591 = vpop.xlane.xlu0 %590
    %592 = vadd.xlane.f32.xlu0 %v589
    %v593 = vpop.xlane.xlu0 %592
    %vm594 = vcmask 7168
    %595 = vst.msk [vmem:[%s10] sm:$0xff] %vm594, %v591
    %596 = vst.msk [vmem:[%s10 + $0x8] sm:$0xff] %vm594, %v593
    // Predicated region
    $region66: #{tpu_custom_call.1} parent=1 // pred_check
      _
    $region67: #{tpu_custom_call.1} parent=1 // pred_check_branch
      %598 = sbr.rel (0) target = $region69
    $region68: #{tpu_custom_call.1} parent=1 // pred_region
      _
    $region69: #{tpu_custom_call.1} parent=1 // pred_fallthru
      _
    // Predicated region
    $region70: #{tpu_custom_call.1} parent=1 // pred_check
      _
    $region71: #{tpu_custom_call.1} parent=1 // pred_check_branch
      %600 = sbr.rel (0) target = $region73
    $region72: #{tpu_custom_call.1} parent=1 // pred_region
      _
    $region73: #{tpu_custom_call.1} parent=1 // pred_fallthru
      _
    %601 = vsyncpa [#allocation3], 1
    %602 = vsyncpa [#allocation5], 1
    %603 = vsyncpa [#allocation8], 1
    %604 = vsyncpa [#allocation11], 1

</llo_original>
